<compile_context>
chip_gen: v7x
topology: tpu7x:2x2x1
jax: 0.10.0
libtpu: 0.0.40
codegen_flags: <defaults>
</compile_context>

<pallas_src>
import functools

import jax
import jax.numpy as jnp
from jax.experimental import pallas as pl
from jax.experimental.pallas import tpu as pltpu

_VMEM_LIMIT = 40 * 1024 * 1024  # safe on v5e/v6e (128 MiB) and v7x (64 MiB physical)


def _round_up(x, m):
    return ((x + m - 1) // m) * m


def _choose_row_tile(n):
    """Row tile: multiple of 8, minimal padding, >=2 row tiles when possible."""
    if n >= 256:
        pad128 = _round_up(n, 128) - n
        pad256 = _round_up(n, 256) - n
        return 256 if pad256 <= pad128 else 128
    # Small N: two row tiles (megacore on v7x), minimal padding, sublane-aligned.
    return max(8, _round_up(n, 16) // 2)


def _l2_normalize_kernel(x_ref, o_ref, *, scale):
    # F.normalize(x, dim=1) == x / max(||x||, 1e-12) == x * rsqrt(max(sumsq, 1e-24)).
    # `scale` folds sqrt(1/T) so downstream dot products produce sim / T directly.
    x = x_ref[...].astype(jnp.float32)
    sumsq = jnp.sum(x * x, axis=1, keepdims=True)
    z = x * (jax.lax.rsqrt(jnp.maximum(sumsq, 1e-24)) * scale)
    o_ref[...] = z.astype(o_ref.dtype)


def _ntxent_kernel(zr_ref, zc_ref, out_ref, pos_acc, denom_acc, *,
                   batch, n_valid, n_pad_cols, tm, tn):
    i = pl.program_id(0)
    j = pl.program_id(1)

    @pl.when(j == 0)
    def _():
        pos_acc[...] = jnp.zeros_like(pos_acc)
        denom_acc[...] = jnp.zeros_like(denom_acc)

    # Gram tile; rows were pre-scaled by sqrt(1/T), so this is already sim / T.
    # Contract embedding axes directly (no explicit transpose temporary).
    sim = jax.lax.dot_general(
        zr_ref[...], zc_ref[...], (((1,), (1,)), ((), ())),
        preferred_element_type=jnp.float32)                    # (tm, tn) f32
    e = jnp.exp(sim)                                           # EUP

    row_start = i * tm
    col_start = j * tn
    row1 = row_start + jax.lax.broadcasted_iota(jnp.int32, (tm, 1), 0)
    col1 = col_start + jax.lax.broadcasted_iota(jnp.int32, (1, tn), 1)

    # Self-similarity (~eye) mask only matters on tiles that touch the diagonal.
    on_diag = (row_start < col_start + tn) & (col_start < row_start + tm)

    @pl.when(on_diag)
    def _():
        keep = col1 != row1                                    # broadcast compare
        denom_acc[...] += jnp.sum(jnp.where(keep, e, 0.0), axis=1, keepdims=True)

    @pl.when(jnp.logical_not(on_diag))
    def _():
        denom_acc[...] += jnp.sum(e, axis=1, keepdims=True)    # unmasked fast path

    # Positive pairs live on the +B / -B bands; only tiles that intersect a band
    # do the extraction work.  Spurious hits land on zero-padded columns (sim==0)
    # or on padded rows (dropped at finalize), so no validity mask is needed.
    hits_plus = ((col_start < row_start + tm + batch) &
                 (col_start + tn > row_start + batch))
    hits_minus = ((col_start < row_start + tm - batch) &
                  (col_start + tn > row_start - batch))

    @pl.when(hits_plus | hits_minus)
    def _():
        is_pos = (col1 == row1 + batch) | (col1 == row1 - batch)
        pos_acc[...] += jnp.sum(jnp.where(is_pos, sim, 0.0), axis=1, keepdims=True)

    @pl.when(j == pl.num_programs(1) - 1)
    def _():
        # Padded (zero) columns each contributed exp(0) == 1 to the denominator.
        denom = denom_acc[...] - jnp.float32(n_pad_cols)
        # -log(exp(pos/T) / denom) == log(denom) - pos/T   (1/T already folded in)
        loss_rows = jnp.log(denom) - pos_acc[...]
        loss_rows = jnp.where(row1 < n_valid, loss_rows, 0.0)  # drop padded rows
        out_ref[...] = jnp.full(out_ref.shape, jnp.sum(loss_rows), dtype=jnp.float32)


def contrastive_loss(emb_i, emb_j, temperature=0.5, use_bf16_matmul=False):
    """NT-Xent contrastive loss, matching ContrastiveLoss.forward semantics."""
    assert emb_i.shape == emb_j.shape and emb_i.ndim == 2
    B, D = emb_i.shape
    N = 2 * B

    # Lane-dense embedding dim; sublane/tile-aligned rows; minimal row padding.
    Dp = _round_up(D, 128)
    TM = _choose_row_tile(N)
    TN = 128 if TM == 256 else TM        # halve live vregs at the largest tile
    Np = _round_up(N, TM)                # TN divides Np in both branches
    num_row = Np // TM
    num_col = Np // TN

    # Concatenate + zero-pad in the wrapper (layout plumbing, single operand).
    z = jnp.concatenate([emb_i, emb_j], axis=0).astype(jnp.float32)   # (N, D)
    z = jnp.pad(z, ((0, Np - N), (0, Dp - D)))                        # (Np, Dp)

    z_dtype = jnp.bfloat16 if use_bf16_matmul else jnp.float32
    scale = float(1.0 / float(temperature)) ** 0.5                    # sqrt(1/T)

    # Prologue: row-wise L2 normalization (rsqrt on the EUP), 1/T folded in,
    # optional one-time bf16 downcast for the MXU operands.
    z_norm = pl.pallas_call(
        functools.partial(_l2_normalize_kernel, scale=scale),
        out_shape=jax.ShapeDtypeStruct((Np, Dp), z_dtype),
        grid=(num_row,),
        in_specs=[pl.BlockSpec((TM, Dp), lambda i: (i, 0))],
        out_specs=pl.BlockSpec((TM, Dp), lambda i: (i, 0)),
        compiler_params=pltpu.CompilerParams(
            dimension_semantics=("parallel",),
            vmem_limit_bytes=_VMEM_LIMIT),
    )(z)

    kernel = functools.partial(
        _ntxent_kernel,
        batch=B, n_valid=N, n_pad_cols=Np - N, tm=TM, tn=TN)

    partial_sums = pl.pallas_call(
        kernel,
        out_shape=jax.ShapeDtypeStruct((num_row, 8, 128), jnp.float32),
        grid=(num_row, num_col),
        in_specs=[
            pl.BlockSpec((TM, Dp), lambda i, j: (i, 0)),   # row tile of z
            pl.BlockSpec((TN, Dp), lambda i, j: (j, 0)),   # col tile of z
        ],
        out_specs=pl.BlockSpec((1, 8, 128), lambda i, j: (i, 0, 0)),
        scratch_shapes=[
            pltpu.VMEM((TM, 1), jnp.float32),   # pos_acc
            pltpu.VMEM((TM, 1), jnp.float32),   # denom_acc
        ],
        compiler_params=pltpu.CompilerParams(
            dimension_semantics=("parallel", "arbitrary"),
            vmem_limit_bytes=_VMEM_LIMIT),
    )(z_norm, z_norm)

    return jnp.sum(partial_sums[:, 0, 0]) / jnp.float32(N)


def _reference_loss(emb_i, emb_j, temperature=0.5):
    # Pure-JAX reference mirroring the PyTorch module.
    def _norm(x):
        n = jnp.sqrt(jnp.sum(x * x, axis=1, keepdims=True))
        return x / jnp.maximum(n, 1e-12)

    B = emb_i.shape[0]
    z = jnp.concatenate([_norm(emb_i), _norm(emb_j)], axis=0)
    sim = z @ z.T
    sim_ij = jnp.diagonal(sim, offset=B)
    sim_ji = jnp.diagonal(sim, offset=-B)
    positives = jnp.concatenate([sim_ij, sim_ji], axis=0)
    neg_mask = 1.0 - jnp.eye(2 * B, dtype=jnp.float32)
    nominator = jnp.exp(positives / temperature)
    denominator = jnp.sum(neg_mask * jnp.exp(sim / temperature), axis=1)
    loss_partial = -jnp.log(nominator / denominator)
    return jnp.sum(loss_partial) / (2 * B)


if __name__ == "__main__":
    batch_size = 8
    dim = 32
    temperature = 0.5

    key = jax.random.PRNGKey(0)
    k1, k2 = jax.random.split(key)
    emb_i = jax.random.normal(k1, (batch_size, dim), dtype=jnp.float32)
    emb_j = jax.random.normal(k2, (batch_size, dim), dtype=jnp.float32)

    loss = contrastive_loss(emb_i, emb_j, temperature=temperature)
    loss = jax.block_until_ready(loss)

    ref = _reference_loss(emb_i, emb_j, temperature=temperature)
    assert jnp.allclose(loss, ref, rtol=1e-5, atol=1e-5), (loss, ref)

    print("KERNEL_OK")
</pallas_src>

<mosaic_0001>
module attributes {stable_mosaic.version = 11 : i64} {
  func.func @_l2_normalize_kernel(%arg0: i32, %arg1: memref<8x128xf32, #tpu.memory_space<vmem>>, %arg2: memref<8x128xf32, #tpu.memory_space<vmem>>) attributes {dimension_semantics = [#tpu.dimension_semantics<parallel>], iteration_bounds = array<i64: 2>, scalar_prefetch = 0 : i64, scratch_operands = 0 : i64, tpu.core_type = #tpu.core_type<tc>, window_params = [{transform_indices = @transform_0, window_bounds = array<i64: 8, 128>}, {transform_indices = @transform_1, window_bounds = array<i64: 8, 128>}]} {
    %c0 = arith.constant 0 : index
    %c0_0 = arith.constant 0 : index
    %0 = vector.load %arg1[%c0, %c0_0] : memref<8x128xf32, #tpu.memory_space<vmem>>, vector<8x128xf32>
    %1 = arith.mulf %0, %0 : vector<8x128xf32>
    %cst = arith.constant dense<0.000000e+00> : vector<8xf32>
    %2 = vector.multi_reduction <add>, %1, %cst [1] : vector<8x128xf32> to vector<8xf32>
    %3 = vector.shape_cast %2 : vector<8xf32> to vector<8x1xf32>
    %cst_1 = arith.constant 1.000000e-24 : f32
    %4 = vector.broadcast %cst_1 : f32 to vector<8x1xf32>
    %5 = arith.maximumf %3, %4 : vector<8x1xf32>
    %6 = math.rsqrt %5 : vector<8x1xf32>
    %cst_2 = arith.constant 1.41421354 : f32
    %7 = vector.broadcast %cst_2 : f32 to vector<8x1xf32>
    %8 = arith.mulf %6, %7 : vector<8x1xf32>
    %9 = vector.broadcast %8 : vector<8x1xf32> to vector<8x128xf32>
    %10 = arith.mulf %0, %9 : vector<8x128xf32>
    %c0_3 = arith.constant 0 : index
    %c0_4 = arith.constant 0 : index
    %11 = vector.load %arg2[%c0_3, %c0_4] : memref<8x128xf32, #tpu.memory_space<vmem>>, vector<8x128xf32>
    tpu.vector_store %arg2[%c0_3, %c0_4], %10 {strides = array<i32>} : memref<8x128xf32, #tpu.memory_space<vmem>>, vector<8x128xf32>,
    return
  }
  func.func @transform_0(%arg0: i32) -> (i32, i32) {
    %c0_i32 = arith.constant 0 : i32
    %c0_i32_0 = arith.constant 0 : i32
    return %arg0, %c0_i32 : i32, i32
  }
  func.func @transform_1(%arg0: i32) -> (i32, i32) {
    %c0_i32 = arith.constant 0 : i32
    %c0_i32_0 = arith.constant 0 : i32
    return %arg0, %c0_i32 : i32, i32
  }
}

</mosaic_0001>

<llo_original>
// kernel: tpu_custom_call.1
$region0: #{tpu_custom_call.1}
  #allocation0 [shape = 'u32[]', space=smem, size = 0x4, offset = 0x4, fixed_abs, tag = 'smem constant byte address 0x4 - core index']
  #allocation1 [shape = 'u32[144,128]{1,0:T(1,128)}', space=vmem, size = 0x12000, scoped, tag = 'internal scratch']
  %s0 = inlined_call_operand.hbm [shape: f32[16,128], index: 0, kind: input, shape index: {}]
  %s1 = inlined_call_operand.hbm [shape: f32[16,128], index: 1, kind: output, shape index: {}]
  %s2 = sld [smem:[#allocation0]]
  $region41: #{tpu_custom_call.1} parent=0
    _
  %s4 = ssub.s32 1, %s2
  %s5 = scalar_select 0, %s4, %s2
  $region1: #{tpu_custom_call.1} parent=0
    #allocation2 [shape = 'u8[8192]{0}', space=vmem, size = 0x2000, scoped, tag = 'input window, operand 0']
    #allocation3 [shape = 's32[2]{0}', space=sflag, size = 0x8, scoped, tag = 'scoped memory for tpu_custom_call.1']
    #allocation4 [shape = 's32[2]{0}', space=sflag, size = 0x8, scoped, tag = 'scoped memory for tpu_custom_call.1']
    #allocation5 [shape = 'u8[8192]{0}', space=vmem, size = 0x2000, scoped, tag = 'output window, operand 0']
    %6 = vsyncpa [#allocation3], 0
    %s7 = scalar_lea.sflag [#allocation3], 1
    %8 = vsyncpa %s7, 0
    %9 = vsyncpa [#allocation4], 0
    %s10 = scalar_lea.sflag [#allocation4], 1
    %11 = vsyncpa %s10, 0
    loop: start=0, step=1, limit=4
    $region2: #{tpu_custom_call.1} parent=1 // loop_pre_header
      _
    $region3: #{tpu_custom_call.1} parent=1 // loop_header
      %s13 = sphi 0, %s17
      %p14 = scmp.ge.s32.totalorder %s13, 4
      %s23 = sphi 0, %s25
      %s26 = sphi 0, %s23
      %s27 = sphi 0, %s26
      %s43 = sphi 0, %s27
      %s49 = sphi 0, %s51
      %s52 = sphi 0, %s49
      %s53 = sphi 0, %s52
      %s69 = sphi 0, %s53
    $region4: #{tpu_custom_call.1} parent=1 // loop_header_branch
      %16 = sbr.rel (%p14) target = $region8
    $region5: #{tpu_custom_call.1} parent=1 // loop_body
      %s18 = ssub.s32 %s13, 1
      %s19 = ssub.s32 %s13, 2
      %s20 = sadd.s32 %s13, 1
      %s21 = ssub.s32 %s13, %s20
      %p22 = scmp.eq.s32.totalorder %s21, 0
      %s24 = sadd.s32 %s23, 1
      %s25 = scalar_select %p22, %s23, %s24
      %p28 = pneg %p22
      %p29 = scmp.eq.s32.totalorder %s13, 1
      %p30 = por %p28, %p29
      %p31 = scmp.ne.s32.totalorder %s23, %s26
      %p32 = scmp.eq.s32.totalorder %s13, 0
      %p33 = por %p31, %p32
      %p34 = scmp.ne.s32.totalorder %s23, %s26
      %p35 = scmp.eq.s32.totalorder %s18, 1
      %p36 = por %p34, %p35
      %p37 = scmp.ne.s32.totalorder %s26, %s27
      %p38 = scmp.eq.s32.totalorder %s18, 0
      %p39 = por %p37, %p38
      %p40 = scmp.ne.s32.totalorder %s26, %s27
      %p41 = scmp.eq.s32.totalorder %s19, 1
      %p42 = por %p40, %p41
      %p44 = scmp.ne.s32.totalorder %s27, %s43
      %p45 = scmp.eq.s32.totalorder %s19, 0
      %p46 = por %p44, %p45
      %s47 = ssub.s32 %s13, %s20
      %p48 = scmp.eq.s32.totalorder %s47, 0
      %s50 = sadd.s32 %s49, 1
      %s51 = scalar_select %p48, %s49, %s50
      %p54 = pneg %p48
      %p55 = scmp.eq.s32.totalorder %s13, 1
      %p56 = por %p54, %p55
      %p57 = scmp.ne.s32.totalorder %s49, %s52
      %p58 = scmp.eq.s32.totalorder %s13, 0
      %p59 = por %p57, %p58
      %p60 = scmp.ne.s32.totalorder %s49, %s52
      %p61 = scmp.eq.s32.totalorder %s18, 1
      %p62 = por %p60, %p61
      %p63 = scmp.ne.s32.totalorder %s52, %s53
      %p64 = scmp.eq.s32.totalorder %s18, 0
      %p65 = por %p63, %p64
      %p66 = scmp.ne.s32.totalorder %s52, %s53
      %p67 = scmp.eq.s32.totalorder %s19, 1
      %p68 = por %p66, %p67
      %p70 = scmp.ne.s32.totalorder %s53, %s69
      %p71 = scmp.eq.s32.totalorder %s19, 0
      %p72 = por %p70, %p71
      %p73 = scmp.le.s32.totalorder 1, %s13
      %p74 = scmp.lt.s32.totalorder %s13, 3
      %p75 = pnand %p73, %p74
      %p76 = pneg %p75
      // Predicated region
      $region9: #{tpu_custom_call.1} parent=5 // pred_check
        _
      $region10: #{tpu_custom_call.1} parent=5 // pred_check_branch
        %78 = sbr.rel (%p75) target = $region12
      $region11: #{tpu_custom_call.1} parent=5 // pred_region
        %s79 = ssub.s32 %s13, 1
      $region12: #{tpu_custom_call.1} parent=5 // pred_fallthru
        _
      %p80 = scmp.lt.s32.totalorder %s13, 2
      // Predicated region
      $region13: #{tpu_custom_call.1} parent=5 // pred_check
        %p81 = pneg %p80
      $region14: #{tpu_custom_call.1} parent=5 // pred_check_branch
        %83 = sbr.rel (%p81) target = $region16
      $region15: #{tpu_custom_call.1} parent=5 // pred_region
        // Predicated region
        $region17: #{tpu_custom_call.1} parent=15 // pred_check
          %p84 = pneg %p33
        $region18: #{tpu_custom_call.1} parent=15 // pred_check_branch
          %86 = sbr.rel (%p84) target = $region20
        $region19: #{tpu_custom_call.1} parent=15 // pred_region
          %s87 = sand.u32 %s23, 1
          %s88 = scalar_lea.sflag [#allocation3], %s87
          %s89 = sand.u32 %s23, 1
          %s90 = smul.addr %s89, 8
          %s91 = scalar_lea.vmem [#allocation2], %s90
          %s93 = ssub.s32 128, 128
          %94 = vsyncadd %s88, %s93
          %s95 = smul.addr %s13, 128
          %s96 = scalar_lea.hbm %s0, %s95
          %s98 = sshll.u32 %s91, 4
          %s99 = int_to_ptr.vmem [resolvable:$true] %s98
          %101 = dma.hbm_to_vmem [thread:$0]  %s96, 128, %s99, %s88
        $region20: #{tpu_custom_call.1} parent=15 // pred_fallthru
          _
      $region16: #{tpu_custom_call.1} parent=5 // pred_fallthru
        _
      %p102 = scmp.le.s32.totalorder 1, %s13
      %p103 = scmp.lt.s32.totalorder %s13, 3
      %p104 = pnand %p102, %p103
      %p105 = pneg %p104
      // Predicated region
      $region21: #{tpu_custom_call.1} parent=5 // pred_check
        _
      $region22: #{tpu_custom_call.1} parent=5 // pred_check_branch
        %107 = sbr.rel (%p104) target = $region24
      $region23: #{tpu_custom_call.1} parent=5 // pred_region
        %s108 = ssub.s32 %s13, 1
        %s109 = sand.u32 %s26, 1
        %s110 = scalar_lea.sflag [#allocation3], %s109
        %s111 = sand.u32 %s26, 1
        %s112 = smul.addr %s111, 8
        %s113 = scalar_lea.vmem [#allocation2], %s112
        // Predicated region
        $region25: #{tpu_custom_call.1} parent=23 // pred_check
          %p114 = pneg %p39
        $region26: #{tpu_custom_call.1} parent=23 // pred_check_branch
          %116 = sbr.rel (%p114) target = $region28
        $region27: #{tpu_custom_call.1} parent=23 // pred_region
          %117 = dma.done %s110, 128
        $region28: #{tpu_custom_call.1} parent=23 // pred_fallthru
          _
        %s118 = sand.u32 %s26, 1
        %s119 = scalar_lea.sflag [#allocation3], %s118
        %s120 = sand.u32 %s26, 1
        %s121 = smul.addr %s120, 8
        %s122 = scalar_lea.vmem [#allocation2], %s121
        %p123 = pneg %p39
        %p124 = pneg %p36
        %p125 = pneg %p65
        %p126 = pneg %p62
        %s127 = sand.u32 %s52, 1
        %s128 = scalar_lea.sflag [#allocation4], %s127
        %s129 = sand.u32 %s52, 1
        %s130 = smul.addr %s129, 8
        %s131 = scalar_lea.vmem [#allocation5], %s130
        %v132 = vld [vmem:[%s113] sm:$0xff]
        %v133 = vmul.f32 %v132, %v132
        %134 = vadd.xlane.f32.xlu0 %v133
        %v135 = vpop.xlane.xlu0 %134
        %v136 = vmax.f32 %v135, 1e-24
        %v137 = vrsqrt.pop %v136
        %v138 = vmul.f32 %v137, 1.4142135
        %v139 = vmul.f32 %v132, %v138
        %140 = vst [vmem:[%s131] sm:$0xff] %v139
        %s141 = sand.u32 %s52, 1
        %s142 = scalar_lea.sflag [#allocation4], %s141
        %s143 = sand.u32 %s52, 1
        %s144 = smul.addr %s143, 8
        %s145 = scalar_lea.vmem [#allocation5], %s144
        // Predicated region
        $region29: #{tpu_custom_call.1} parent=23 // pred_check
          %p146 = pneg %p62
        $region30: #{tpu_custom_call.1} parent=23 // pred_check_branch
          %148 = sbr.rel (%p146) target = $region32
        $region31: #{tpu_custom_call.1} parent=23 // pred_region
          %s150 = ssub.s32 128, 128
          %151 = vsyncadd %s142, %s150
          %s152 = smul.addr %s18, 128
          %s153 = scalar_lea.hbm %s1, %s152
          %s155 = sshll.u32 %s145, 4
          %s156 = int_to_ptr.vmem [resolvable:$true] %s155
          %158 = dma.vmem_to_hbm [thread:$0]  %s156, 128, %s153, %s142
        $region32: #{tpu_custom_call.1} parent=23 // pred_fallthru
          _
      $region24: #{tpu_custom_call.1} parent=5 // pred_fallthru
        _
      %p159 = scmp.le.s32.totalorder 2, %s13
      // Predicated region
      $region33: #{tpu_custom_call.1} parent=5 // pred_check
        %p160 = pneg %p159
      $region34: #{tpu_custom_call.1} parent=5 // pred_check_branch
        %162 = sbr.rel (%p160) target = $region36
      $region35: #{tpu_custom_call.1} parent=5 // pred_region
        %s163 = ssub.s32 %s13, 2
        // Predicated region
        $region37: #{tpu_custom_call.1} parent=35 // pred_check
          %p164 = pneg %p68
        $region38: #{tpu_custom_call.1} parent=35 // pred_check_branch
          %166 = sbr.rel (%p164) target = $region40
        $region39: #{tpu_custom_call.1} parent=35 // pred_region
          %s167 = sand.u32 %s53, 1
          %s168 = scalar_lea.sflag [#allocation4], %s167
          %s169 = sand.u32 %s53, 1
          %s170 = smul.addr %s169, 8
          %s171 = scalar_lea.vmem [#allocation5], %s170
          %172 = dma.done %s168, 128
        $region40: #{tpu_custom_call.1} parent=35 // pred_fallthru
          _
      $region36: #{tpu_custom_call.1} parent=5 // pred_fallthru
        _
    $region6: #{tpu_custom_call.1} parent=1 // loop_footer
      %s17 = sadd.s32 1, %s13
    $region7: #{tpu_custom_call.1} parent=1 // loop_footer_branch
      %12 = sbr.rel target = $region3
    $region8: #{tpu_custom_call.1} parent=1 // loop_exit
      _
    %173 = vsyncpa [#allocation3], 1
    %s174 = scalar_lea.sflag [#allocation3], 1
    %175 = vsyncpa %s174, 1
    %176 = vsyncpa [#allocation4], 1
    %s177 = scalar_lea.sflag [#allocation4], 1
    %178 = vsyncpa %s177, 1

</llo_original>
